<compile_context>
chip_gen: v6e
topology: v6e:2x2x1
jax: 0.10.0
libtpu: 0.0.40
codegen_flags: <defaults>
</compile_context>

<pallas_src>
import functools

import numpy as np
import jax
import jax.numpy as jnp
from jax.experimental import pallas as pl
from jax.experimental.pallas import tpu as pltpu

_TWO_PI = 2.0 * np.pi


def _round_up(x: int, m: int) -> int:
    return ((x + m - 1) // m) * m


def _make_mod_mvn_kernel(k: int):
    two_pi = np.float32(_TWO_PI)
    kf = np.float32(k)
    k_over_2pi = np.float32(k / _TWO_PI)        # folded scale: one multiply, no divide
    use_lut = k <= 16                            # larger k: chain would spill vregs
    if use_lut:
        cos_tab = [np.float32(np.cos(_TWO_PI * i / k)) for i in range(k)]
        sin_tab = [np.float32(np.sin(_TWO_PI * i / k)) for i in range(k)]
    else:
        bucket_width = np.float32(_TWO_PI / k)

    def kernel(re_ref, im_ref, ore_ref, oim_ref):
        re = re_ref[...]            # (tile_rows, 128) dense f32 plane
        im = im_ref[...]

        # magnitude = |z|  (sqrt goes to the EUP slot)
        mag = jnp.sqrt(re * re + im * im)

        # phase = angle(z) in [-pi, pi]; wrap to [0, 2*pi) with one select.
        # Bit-equivalent to jnp.mod(phase, 2*pi) on this range, no divide.
        phase = jnp.arctan2(im, re)
        phase = jnp.where(phase < 0, phase + two_pi, phase)

        # a = round(phase * k / (2*pi)) with the scale pre-folded; a in [0, k].
        a = jnp.round(phase * k_over_2pi)
        # replace `% k`: the only possible wrap is a == k -> 0.
        a = jnp.where(a >= kf, a - kf, a)

        if use_lut:
            # k-way compare/select over precomputed unit-circle points
            # (pure VALU, no sin/cos polynomial).
            # TODO(synk): sin-from-cos (sqrt(1-c^2) on the EUP) or the
            # max-dot-product quantizer would shave more VALU ops but change
            # results at bucket boundaries / tiny-sine buckets; kept exact LUT.
            cos_v = jnp.full_like(a, cos_tab[0])
            sin_v = jnp.full_like(a, sin_tab[0])
            for i in range(1, k):
                sel = a == np.float32(i)
                cos_v = jnp.where(sel, cos_tab[i], cos_v)
                sin_v = jnp.where(sel, sin_tab[i], sin_v)
        else:
            new_phase = bucket_width * a
            cos_v = jnp.cos(new_phase)
            sin_v = jnp.sin(new_phase)

        ore_ref[...] = mag * cos_v
        oim_ref[...] = mag * sin_v

    return kernel


@functools.partial(jax.jit, static_argnames=("k",))
def mod_mvn(z: jax.Array, k: int = 10) -> jax.Array:
    """Pallas implementation of ModMVN.forward for complex64 inputs."""
    orig_shape = z.shape
    # TODO(synk): complex64 Refs aren't supported by Mosaic and the interleaved
    # bitcast view can't be de-interleaved into dense lanes cheaply in-kernel,
    # so the complex<->planar split/recombine stays in the XLA wrapper (it now
    # fuses into neighbors since the pad/stack passes are gone).
    re = jnp.real(z).astype(jnp.float32).reshape(-1)
    im = jnp.imag(z).astype(jnp.float32).reshape(-1)
    n = re.shape[0]

    lane = 128
    rows = _round_up(max(pl.cdiv(n, lane), 1), 8)
    n_min = rows * lane
    if n_min != n:   # only the 8x128 reshape padding; NO tile-multiple padding
        re = jnp.pad(re, (0, n_min - n))
        im = jnp.pad(im, (0, n_min - n))
    re2 = re.reshape(rows, lane)
    im2 = im.reshape(rows, lane)

    # Tile sizing: aim for >= 4 grid steps when rows permit (keeps both v7x
    # TensorCores double-buffered), capped at 2048 rows -> 1 MiB per plane per
    # block, 2 in + 2 out double-buffered = 8 MiB VMEM (fits v5e's 16 MiB
    # default scoped VMEM and v7x's 64 MiB physical with headroom).
    tile_rows = min(2048, _round_up(pl.cdiv(rows, 4), 8))
    grid = (pl.cdiv(rows, tile_rows),)   # partial last block handled by Pallas

    spec = pl.BlockSpec((tile_rows, lane), lambda i: (i, 0))

    n_el = rows * lane
    cost = pl.CostEstimate(
        flops=(50 + 3 * k) * n_el,      # mag + atan2 poly + quantize + LUT chain
        transcendentals=2 * n_el,       # sqrt + atan2
        bytes_accessed=16 * n_el,       # 2 f32 planes in + 2 f32 planes out
    )

    out_re, out_im = pl.pallas_call(
        _make_mod_mvn_kernel(k),
        out_shape=(
            jax.ShapeDtypeStruct((rows, lane), jnp.float32),
            jax.ShapeDtypeStruct((rows, lane), jnp.float32),
        ),
        grid=grid,
        in_specs=[spec, spec],
        out_specs=(spec, spec),
        input_output_aliases={0: 0, 1: 1},   # outputs reuse the input buffers
        compiler_params=pltpu.CompilerParams(
            dimension_semantics=("parallel",),
            vmem_limit_bytes=32 * 1024 * 1024,
        ),
        cost_estimate=cost,
    )(re2, im2)

    out_re = out_re.reshape(-1)[:n]
    out_im = out_im.reshape(-1)[:n]
    return jax.lax.complex(out_re, out_im).reshape(orig_shape).astype(jnp.complex64)


def _ref_mod_mvn(z, k=10):
    """Pure-JAX reference matching the PyTorch forward."""
    magnitude = jnp.abs(z)
    phase = jnp.angle(z)
    phase = jnp.mod(phase, 2 * np.pi)
    a = jnp.mod(jnp.round(phase * k / (2 * np.pi)), k)
    new_phase = 2 * np.pi * a / k
    return (magnitude * jnp.exp(1j * new_phase)).astype(jnp.complex64)


if __name__ == "__main__":
    key = jax.random.PRNGKey(0)
    k_re, k_im = jax.random.split(key)
    shape = (2, 4, 16, 16)
    re = jax.random.normal(k_re, shape, dtype=jnp.float32)
    im = jax.random.normal(k_im, shape, dtype=jnp.float32)
    z = (re + 1j * im).astype(jnp.complex64)

    out = jax.block_until_ready(mod_mvn(z, k=10))

    ref = _ref_mod_mvn(z, k=10)
    np.testing.assert_allclose(np.asarray(out), np.asarray(ref), rtol=1e-5, atol=1e-5)

    assert out.shape == z.shape and out.dtype == jnp.complex64
    print("KERNEL_OK")
</pallas_src>

<mosaic_0001>
module attributes {stable_mosaic.version = 11 : i64} {
  func.func @kernel(%arg0: i32, %arg1: memref<8x128xf32, #tpu.memory_space<vmem>>, %arg2: memref<8x128xf32, #tpu.memory_space<vmem>>, %arg3: memref<8x128xf32, #tpu.memory_space<vmem>>, %arg4: memref<8x128xf32, #tpu.memory_space<vmem>>) attributes {dimension_semantics = [#tpu.dimension_semantics<parallel>], iteration_bounds = array<i64: 2>, scalar_prefetch = 0 : i64, scratch_operands = 0 : i64, tpu.core_type = #tpu.core_type<tc>, window_params = [{transform_indices = @transform_0, window_bounds = array<i64: 8, 128>}, {transform_indices = @transform_1, window_bounds = array<i64: 8, 128>}, {transform_indices = @transform_2, window_bounds = array<i64: 8, 128>}, {transform_indices = @transform_3, window_bounds = array<i64: 8, 128>}]} {
    %c0 = arith.constant 0 : index
    %c0_0 = arith.constant 0 : index
    %0 = vector.load %arg1[%c0, %c0_0] : memref<8x128xf32, #tpu.memory_space<vmem>>, vector<8x128xf32>
    %c0_1 = arith.constant 0 : index
    %c0_2 = arith.constant 0 : index
    %1 = vector.load %arg2[%c0_1, %c0_2] : memref<8x128xf32, #tpu.memory_space<vmem>>, vector<8x128xf32>
    %2 = arith.mulf %0, %0 : vector<8x128xf32>
    %3 = arith.mulf %1, %1 : vector<8x128xf32>
    %4 = arith.addf %2, %3 : vector<8x128xf32>
    %5 = math.sqrt %4 : vector<8x128xf32>
    %6 = math.atan2 %1, %0 : vector<8x128xf32>
    %cst = arith.constant 0.000000e+00 : f32
    %7 = vector.broadcast %cst : f32 to vector<8x128xf32>
    %8 = arith.cmpf olt, %6, %7 : vector<8x128xf32>
    %cst_3 = arith.constant 6.28318548 : f32
    %9 = vector.broadcast %cst_3 : f32 to vector<8x128xf32>
    %10 = arith.addf %6, %9 : vector<8x128xf32>
    %11 = arith.select %8, %10, %6 : vector<8x128xi1>, vector<8x128xf32>
    %cst_4 = arith.constant 1.5915494 : f32
    %12 = vector.broadcast %cst_4 : f32 to vector<8x128xf32>
    %13 = arith.mulf %11, %12 : vector<8x128xf32>
    %14 = math.roundeven %13 : vector<8x128xf32>
    %cst_5 = arith.constant 1.000000e+01 : f32
    %15 = vector.broadcast %cst_5 : f32 to vector<8x128xf32>
    %16 = arith.cmpf oge, %14, %15 : vector<8x128xf32>
    %cst_6 = arith.constant 1.000000e+01 : f32
    %17 = vector.broadcast %cst_6 : f32 to vector<8x128xf32>
    %18 = arith.subf %14, %17 : vector<8x128xf32>
    %19 = arith.select %16, %18, %14 : vector<8x128xi1>, vector<8x128xf32>
    %cst_7 = arith.constant 1.000000e+00 : f32
    %20 = vector.broadcast %cst_7 : f32 to vector<8x128xf32>
    %cst_8 = arith.constant 0.000000e+00 : f32
    %21 = vector.broadcast %cst_8 : f32 to vector<8x128xf32>
    %cst_9 = arith.constant 1.000000e+00 : f32
    %22 = vector.broadcast %cst_9 : f32 to vector<8x128xf32>
    %23 = arith.cmpf oeq, %19, %22 : vector<8x128xf32>
    %cst_10 = arith.constant 8.090170e-01 : f32
    %24 = vector.broadcast %cst_10 : f32 to vector<8x128xf32>
    %25 = arith.select %23, %24, %20 : vector<8x128xi1>, vector<8x128xf32>
    %cst_11 = arith.constant 0.587785244 : f32
    %26 = vector.broadcast %cst_11 : f32 to vector<8x128xf32>
    %27 = arith.select %23, %26, %21 : vector<8x128xi1>, vector<8x128xf32>
    %cst_12 = arith.constant 2.000000e+00 : f32
    %28 = vector.broadcast %cst_12 : f32 to vector<8x128xf32>
    %29 = arith.cmpf oeq, %19, %28 : vector<8x128xf32>
    %cst_13 = arith.constant 3.090170e-01 : f32
    %30 = vector.broadcast %cst_13 : f32 to vector<8x128xf32>
    %31 = arith.select %29, %30, %25 : vector<8x128xi1>, vector<8x128xf32>
    %cst_14 = arith.constant 0.95105654 : f32
    %32 = vector.broadcast %cst_14 : f32 to vector<8x128xf32>
    %33 = arith.select %29, %32, %27 : vector<8x128xi1>, vector<8x128xf32>
    %cst_15 = arith.constant 3.000000e+00 : f32
    %34 = vector.broadcast %cst_15 : f32 to vector<8x128xf32>
    %35 = arith.cmpf oeq, %19, %34 : vector<8x128xf32>
    %cst_16 = arith.constant -3.090170e-01 : f32
    %36 = vector.broadcast %cst_16 : f32 to vector<8x128xf32>
    %37 = arith.select %35, %36, %31 : vector<8x128xi1>, vector<8x128xf32>
    %cst_17 = arith.constant 0.95105654 : f32
    %38 = vector.broadcast %cst_17 : f32 to vector<8x128xf32>
    %39 = arith.select %35, %38, %33 : vector<8x128xi1>, vector<8x128xf32>
    %cst_18 = arith.constant 4.000000e+00 : f32
    %40 = vector.broadcast %cst_18 : f32 to vector<8x128xf32>
    %41 = arith.cmpf oeq, %19, %40 : vector<8x128xf32>
    %cst_19 = arith.constant -8.090170e-01 : f32
    %42 = vector.broadcast %cst_19 : f32 to vector<8x128xf32>
    %43 = arith.select %41, %42, %37 : vector<8x128xi1>, vector<8x128xf32>
    %cst_20 = arith.constant 0.587785244 : f32
    %44 = vector.broadcast %cst_20 : f32 to vector<8x128xf32>
    %45 = arith.select %41, %44, %39 : vector<8x128xi1>, vector<8x128xf32>
    %cst_21 = arith.constant 5.000000e+00 : f32
    %46 = vector.broadcast %cst_21 : f32 to vector<8x128xf32>
    %47 = arith.cmpf oeq, %19, %46 : vector<8x128xf32>
    %cst_22 = arith.constant -1.000000e+00 : f32
    %48 = vector.broadcast %cst_22 : f32 to vector<8x128xf32>
    %49 = arith.select %47, %48, %43 : vector<8x128xi1>, vector<8x128xf32>
    %cst_23 = arith.constant 1.22464685E-16 : f32
    %50 = vector.broadcast %cst_23 : f32 to vector<8x128xf32>
    %51 = arith.select %47, %50, %45 : vector<8x128xi1>, vector<8x128xf32>
    %cst_24 = arith.constant 6.000000e+00 : f32
    %52 = vector.broadcast %cst_24 : f32 to vector<8x128xf32>
    %53 = arith.cmpf oeq, %19, %52 : vector<8x128xf32>
    %cst_25 = arith.constant -8.090170e-01 : f32
    %54 = vector.broadcast %cst_25 : f32 to vector<8x128xf32>
    %55 = arith.select %53, %54, %49 : vector<8x128xi1>, vector<8x128xf32>
    %cst_26 = arith.constant -0.587785244 : f32
    %56 = vector.broadcast %cst_26 : f32 to vector<8x128xf32>
    %57 = arith.select %53, %56, %51 : vector<8x128xi1>, vector<8x128xf32>
    %cst_27 = arith.constant 7.000000e+00 : f32
    %58 = vector.broadcast %cst_27 : f32 to vector<8x128xf32>
    %59 = arith.cmpf oeq, %19, %58 : vector<8x128xf32>
    %cst_28 = arith.constant -3.090170e-01 : f32
    %60 = vector.broadcast %cst_28 : f32 to vector<8x128xf32>
    %61 = arith.select %59, %60, %55 : vector<8x128xi1>, vector<8x128xf32>
    %cst_29 = arith.constant -0.95105654 : f32
    %62 = vector.broadcast %cst_29 : f32 to vector<8x128xf32>
    %63 = arith.select %59, %62, %57 : vector<8x128xi1>, vector<8x128xf32>
    %cst_30 = arith.constant 8.000000e+00 : f32
    %64 = vector.broadcast %cst_30 : f32 to vector<8x128xf32>
    %65 = arith.cmpf oeq, %19, %64 : vector<8x128xf32>
    %cst_31 = arith.constant 3.090170e-01 : f32
    %66 = vector.broadcast %cst_31 : f32 to vector<8x128xf32>
    %67 = arith.select %65, %66, %61 : vector<8x128xi1>, vector<8x128xf32>
    %cst_32 = arith.constant -0.95105654 : f32
    %68 = vector.broadcast %cst_32 : f32 to vector<8x128xf32>
    %69 = arith.select %65, %68, %63 : vector<8x128xi1>, vector<8x128xf32>
    %cst_33 = arith.constant 9.000000e+00 : f32
    %70 = vector.broadcast %cst_33 : f32 to vector<8x128xf32>
    %71 = arith.cmpf oeq, %19, %70 : vector<8x128xf32>
    %cst_34 = arith.constant 8.090170e-01 : f32
    %72 = vector.broadcast %cst_34 : f32 to vector<8x128xf32>
    %73 = arith.select %71, %72, %67 : vector<8x128xi1>, vector<8x128xf32>
    %cst_35 = arith.constant -0.587785244 : f32
    %74 = vector.broadcast %cst_35 : f32 to vector<8x128xf32>
    %75 = arith.select %71, %74, %69 : vector<8x128xi1>, vector<8x128xf32>
    %76 = arith.mulf %5, %73 : vector<8x128xf32>
    %c0_36 = arith.constant 0 : index
    %c0_37 = arith.constant 0 : index
    %77 = vector.load %arg3[%c0_36, %c0_37] : memref<8x128xf32, #tpu.memory_space<vmem>>, vector<8x128xf32>
    tpu.vector_store %arg3[%c0_36, %c0_37], %76 {strides = array<i32>} : memref<8x128xf32, #tpu.memory_space<vmem>>, vector<8x128xf32>,
    %78 = arith.mulf %5, %75 : vector<8x128xf32>
    %c0_38 = arith.constant 0 : index
    %c0_39 = arith.constant 0 : index
    %79 = vector.load %arg4[%c0_38, %c0_39] : memref<8x128xf32, #tpu.memory_space<vmem>>, vector<8x128xf32>
    tpu.vector_store %arg4[%c0_38, %c0_39], %78 {strides = array<i32>} : memref<8x128xf32, #tpu.memory_space<vmem>>, vector<8x128xf32>,
    return
  }
  func.func @transform_0(%arg0: i32) -> (i32, i32) {
    %c0_i32 = arith.constant 0 : i32
    %c0_i32_0 = arith.constant 0 : i32
    return %arg0, %c0_i32 : i32, i32
  }
  func.func @transform_1(%arg0: i32) -> (i32, i32) {
    %c0_i32 = arith.constant 0 : i32
    %c0_i32_0 = arith.constant 0 : i32
    return %arg0, %c0_i32 : i32, i32
  }
  func.func @transform_2(%arg0: i32) -> (i32, i32) {
    %c0_i32 = arith.constant 0 : i32
    %c0_i32_0 = arith.constant 0 : i32
    return %arg0, %c0_i32 : i32, i32
  }
  func.func @transform_3(%arg0: i32) -> (i32, i32) {
    %c0_i32 = arith.constant 0 : i32
    %c0_i32_0 = arith.constant 0 : i32
    return %arg0, %c0_i32 : i32, i32
  }
}

</mosaic_0001>

<llo_original>
// kernel: custom-call.1
$region0: #{custom-call.1}
  %s0 = inlined_call_operand.hbm [shape: c64[2,4,16,16], index: 0, kind: input, shape index: {}]
  %s1 = inlined_call_operand.vmem [shape: f32[2,4,16,16], index: 1, kind: output, shape index: {}]
  %s2 = scalar_lea.hbm %s0, 2048
  $region1: #{custom-call.1} parent=0
    #allocation0 [shape = 's32[1]{0}', space=sflag, size = 0x4, scoped, tag = 'scoped memory for custom-call.1']
    %3 = vsyncpa [#allocation0], 0
    %s4 = sshll.u32 %s1, 4
    %s5 = int_to_ptr.vmem [resolvable:$true] %s4
    %7 = dma.hbm_to_vmem [thread:$0]  %s2, 2048, %s5, [#allocation0]
    %8 = dma.done [#allocation0], 2048
    %9 = vsyncpa [#allocation0], 1

// kernel: custom-call
$region0: #{custom-call}
  %s0 = inlined_call_operand.hbm [shape: c64[2,4,16,16], index: 0, kind: input, shape index: {}]
  %s1 = inlined_call_operand.vmem [shape: f32[2,4,16,16], index: 1, kind: output, shape index: {}]
  $region1: #{custom-call} parent=0
    #allocation0 [shape = 's32[1]{0}', space=sflag, size = 0x4, scoped, tag = 'scoped memory for custom-call']
    %2 = vsyncpa [#allocation0], 0
    %s3 = sshll.u32 %s1, 4
    %s4 = int_to_ptr.vmem [resolvable:$true] %s3
    %6 = dma.hbm_to_vmem [thread:$0]  %s0, 2048, %s4, [#allocation0]
    %7 = dma.done [#allocation0], 2048
    %8 = vsyncpa [#allocation0], 1

// kernel: custom-call.2
$region0: #{custom-call.2}
  %s0 = inlined_call_operand.vmem [shape: f32[2,4,16,16], index: 0, kind: input, shape index: {}]
  %s1 = inlined_call_operand.vmem [shape: f32[2,4,16,16], index: 1, kind: input, shape index: {}]
  %s2 = inlined_call_operand.hbm [shape: c64[2,4,16,16], index: 2, kind: output, shape index: {}]
  %s3 = scalar_lea.hbm %s2, 2048
  $region1: #{custom-call.2} parent=0
    #allocation0 [shape = 's32[1]{0}', space=sflag, size = 0x4, scoped, tag = 'scoped memory for custom-call.2']
    %4 = vsyncpa [#allocation0], 0
    %s5 = sshll.u32 %s0, 4
    %s6 = int_to_ptr.vmem [resolvable:$true] %s5
    %8 = dma.vmem_to_hbm [thread:$0]  %s6, 2048, %s2, [#allocation0]
    %9 = dma.done [#allocation0], 2048
    %10 = vsyncpa [#allocation0], 1
  $region2: #{custom-call.2} parent=0
    #allocation1 [shape = 's32[1]{0}', space=sflag, size = 0x4, scoped, tag = 'scoped memory for custom-call.2']
    %11 = vsyncpa [#allocation1], 0
    %s12 = sshll.u32 %s1, 4
    %s13 = int_to_ptr.vmem [resolvable:$true] %s12
    %15 = dma.vmem_to_hbm [thread:$0]  %s13, 2048, %s3, [#allocation1]
    %16 = dma.done [#allocation1], 2048
    %17 = vsyncpa [#allocation1], 1

// kernel: mod_mvn.1
$region0: #{mod_mvn.1}
  #allocation0 [shape = 'u32[]', space=smem, size = 0x4, offset = 0x4, fixed_abs, tag = 'smem constant byte address 0x4 - core index']
  #allocation1 [shape = 'u32[144,128]{1,0:T(1,128)}', space=vmem, size = 0x12000, scoped, tag = 'internal scratch']
  %s0 = inlined_call_operand.vmem [shape: f32[16,128], index: 0, kind: input, shape index: {}, may-alias: {0,2}]
  %s1 = inlined_call_operand.vmem [shape: f32[16,128], index: 1, kind: input, shape index: {}, may-alias: {1,3}]
  %s2 = inlined_call_operand.vmem [shape: f32[16,128], index: 2, kind: output, shape index: {0}, may-alias: {0,2}]
  %s3 = inlined_call_operand.vmem [shape: f32[16,128], index: 3, kind: output, shape index: {1}, may-alias: {1,3}]
  %4 = xla_tuple %s2, %s3
  %s5 = sld [smem:[#allocation0]]
  $region49: #{mod_mvn.1} parent=0
    _
  %s7 = ssub.s32 1, %s5
  %s8 = scalar_select 0, %s7, %s5
  loop: start=0, step=1, limit=4
  $region2: #{mod_mvn.1} parent=0 // loop_pre_header
    _
  $region3: #{mod_mvn.1} parent=0 // loop_header
    %s10 = sphi 0, %s14
    %p11 = scmp.ge.s32.totalorder %s10, 4
    %s20 = sphi 0, %s22
    %s23 = sphi 0, %s20
    %s24 = sphi 0, %s23
    %s40 = sphi 0, %s24
    %s46 = sphi 0, %s48
    %s49 = sphi 0, %s46
    %s50 = sphi 0, %s49
    %s66 = sphi 0, %s50
    %s72 = sphi 0, %s74
    %s75 = sphi 0, %s72
    %s76 = sphi 0, %s75
    %s92 = sphi 0, %s76
    %s98 = sphi 0, %s100
    %s101 = sphi 0, %s98
    %s102 = sphi 0, %s101
    %s118 = sphi 0, %s102
  $region4: #{mod_mvn.1} parent=0 // loop_header_branch
    %13 = sbr.rel (%p11) target = $region8
  $region5: #{mod_mvn.1} parent=0 // loop_body
    %s15 = ssub.s32 %s10, 1
    %s16 = ssub.s32 %s10, 2
    %s17 = sadd.s32 %s10, 1
    %s18 = ssub.s32 %s10, %s17
    %p19 = scmp.eq.s32.totalorder %s18, 0
    %s21 = sadd.s32 %s20, 1
    %s22 = scalar_select %p19, %s20, %s21
    %p25 = pneg %p19
    %p26 = scmp.eq.s32.totalorder %s10, 1
    %p27 = por %p25, %p26
    %p28 = scmp.ne.s32.totalorder %s20, %s23
    %p29 = scmp.eq.s32.totalorder %s10, 0
    %p30 = por %p28, %p29
    %p31 = scmp.ne.s32.totalorder %s20, %s23
    %p32 = scmp.eq.s32.totalorder %s15, 1
    %p33 = por %p31, %p32
    %p34 = scmp.ne.s32.totalorder %s23, %s24
    %p35 = scmp.eq.s32.totalorder %s15, 0
    %p36 = por %p34, %p35
    %p37 = scmp.ne.s32.totalorder %s23, %s24
    %p38 = scmp.eq.s32.totalorder %s16, 1
    %p39 = por %p37, %p38
    %p41 = scmp.ne.s32.totalorder %s24, %s40
    %p42 = scmp.eq.s32.totalorder %s16, 0
    %p43 = por %p41, %p42
    %s44 = ssub.s32 %s10, %s17
    %p45 = scmp.eq.s32.totalorder %s44, 0
    %s47 = sadd.s32 %s46, 1
    %s48 = scalar_select %p45, %s46, %s47
    %p51 = pneg %p45
    %p52 = scmp.eq.s32.totalorder %s10, 1
    %p53 = por %p51, %p52
    %p54 = scmp.ne.s32.totalorder %s46, %s49
    %p55 = scmp.eq.s32.totalorder %s10, 0
    %p56 = por %p54, %p55
    %p57 = scmp.ne.s32.totalorder %s46, %s49
    %p58 = scmp.eq.s32.totalorder %s15, 1
    %p59 = por %p57, %p58
    %p60 = scmp.ne.s32.totalorder %s49, %s50
    %p61 = scmp.eq.s32.totalorder %s15, 0
    %p62 = por %p60, %p61
    %p63 = scmp.ne.s32.totalorder %s49, %s50
    %p64 = scmp.eq.s32.totalorder %s16, 1
    %p65 = por %p63, %p64
    %p67 = scmp.ne.s32.totalorder %s50, %s66
    %p68 = scmp.eq.s32.totalorder %s16, 0
    %p69 = por %p67, %p68
    %s70 = ssub.s32 %s10, %s17
    %p71 = scmp.eq.s32.totalorder %s70, 0
    %s73 = sadd.s32 %s72, 1
    %s74 = scalar_select %p71, %s72, %s73
    %p77 = pneg %p71
    %p78 = scmp.eq.s32.totalorder %s10, 1
    %p79 = por %p77, %p78
    %p80 = scmp.ne.s32.totalorder %s72, %s75
    %p81 = scmp.eq.s32.totalorder %s10, 0
    %p82 = por %p80, %p81
    %p83 = scmp.ne.s32.totalorder %s72, %s75
    %p84 = scmp.eq.s32.totalorder %s15, 1
    %p85 = por %p83, %p84
    %p86 = scmp.ne.s32.totalorder %s75, %s76
    %p87 = scmp.eq.s32.totalorder %s15, 0
    %p88 = por %p86, %p87
    %p89 = scmp.ne.s32.totalorder %s75, %s76
    %p90 = scmp.eq.s32.totalorder %s16, 1
    %p91 = por %p89, %p90
    %p93 = scmp.ne.s32.totalorder %s76, %s92
    %p94 = scmp.eq.s32.totalorder %s16, 0
    %p95 = por %p93, %p94
    %s96 = ssub.s32 %s10, %s17
    %p97 = scmp.eq.s32.totalorder %s96, 0
    %s99 = sadd.s32 %s98, 1
    %s100 = scalar_select %p97, %s98, %s99
    %p103 = pneg %p97
    %p104 = scmp.eq.s32.totalorder %s10, 1
    %p105 = por %p103, %p104
    %p106 = scmp.ne.s32.totalorder %s98, %s101
    %p107 = scmp.eq.s32.totalorder %s10, 0
    %p108 = por %p106, %p107
    %p109 = scmp.ne.s32.totalorder %s98, %s101
    %p110 = scmp.eq.s32.totalorder %s15, 1
    %p111 = por %p109, %p110
    %p112 = scmp.ne.s32.totalorder %s101, %s102
    %p113 = scmp.eq.s32.totalorder %s15, 0
    %p114 = por %p112, %p113
    %p115 = scmp.ne.s32.totalorder %s101, %s102
    %p116 = scmp.eq.s32.totalorder %s16, 1
    %p117 = por %p115, %p116
    %p119 = scmp.ne.s32.totalorder %s102, %s118
    %p120 = scmp.eq.s32.totalorder %s16, 0
    %p121 = por %p119, %p120
    %p122 = scmp.le.s32.totalorder 1, %s10
    %p123 = scmp.lt.s32.totalorder %s10, 3
    %p124 = pnand %p122, %p123
    %p125 = pneg %p124
    // Predicated region
    $region9: #{mod_mvn.1} parent=5 // pred_check
      _
    $region10: #{mod_mvn.1} parent=5 // pred_check_branch
      %127 = sbr.rel (%p124) target = $region12
    $region11: #{mod_mvn.1} parent=5 // pred_region
      %s128 = ssub.s32 %s10, 1
    $region12: #{mod_mvn.1} parent=5 // pred_fallthru
      _
    %p129 = scmp.lt.s32.totalorder %s10, 2
    // Predicated region
    $region13: #{mod_mvn.1} parent=5 // pred_check
      %p130 = pneg %p129
    $region14: #{mod_mvn.1} parent=5 // pred_check_branch
      %132 = sbr.rel (%p130) target = $region16
    $region15: #{mod_mvn.1} parent=5 // pred_region
      // Predicated region
      $region17: #{mod_mvn.1} parent=15 // pred_check
        %p133 = pneg %p30
      $region18: #{mod_mvn.1} parent=15 // pred_check_branch
        %135 = sbr.rel (%p133) target = $region20
      $region19: #{mod_mvn.1} parent=15 // pred_region
        %p136 = scmp.lt.s32.totalorder %s10, 1
        %s137 = scalar_select %p136, %s10, 1
        %s138 = smul.addr %s137, 8
        %s139 = scalar_lea.vmem %s0, %s138
      $region20: #{mod_mvn.1} parent=15 // pred_fallthru
        _
      // Predicated region
      $region21: #{mod_mvn.1} parent=15 // pred_check
        %p140 = pneg %p56
      $region22: #{mod_mvn.1} parent=15 // pred_check_branch
        %142 = sbr.rel (%p140) target = $region24
      $region23: #{mod_mvn.1} parent=15 // pred_region
        %p143 = scmp.lt.s32.totalorder %s10, 1
        %s144 = scalar_select %p143, %s10, 1
        %s145 = smul.addr %s144, 8
        %s146 = scalar_lea.vmem %s1, %s145
      $region24: #{mod_mvn.1} parent=15 // pred_fallthru
        _
    $region16: #{mod_mvn.1} parent=5 // pred_fallthru
      _
    %p147 = scmp.le.s32.totalorder 1, %s10
    %p148 = scmp.lt.s32.totalorder %s10, 3
    %p149 = pnand %p147, %p148
    %p150 = pneg %p149
    // Predicated region
    $region25: #{mod_mvn.1} parent=5 // pred_check
      _
    $region26: #{mod_mvn.1} parent=5 // pred_check_branch
      %152 = sbr.rel (%p149) target = $region28
    $region27: #{mod_mvn.1} parent=5 // pred_region
      %s153 = ssub.s32 %s10, 1
      %p154 = scmp.lt.s32.totalorder %s15, 1
      %s155 = scalar_select %p154, %s15, 1
      %s156 = smul.addr %s155, 8
      %s157 = scalar_lea.vmem %s0, %s156
      %p158 = pneg %p36
      %p159 = pneg %p33
      %p160 = scmp.lt.s32.totalorder %s15, 1
      %s161 = scalar_select %p160, %s15, 1
      %s162 = smul.addr %s161, 8
      %s163 = scalar_lea.vmem %s1, %s162
      %p164 = pneg %p62
      %p165 = pneg %p59
      %p166 = pneg %p88
      %p167 = pneg %p85
      %p168 = scmp.lt.s32.totalorder %s15, 1
      %s169 = scalar_select %p168, %s15, 1
      %s170 = smul.addr %s169, 8
      %s171 = scalar_lea.vmem %s2, %s170
      %p172 = pneg %p114
      %p173 = pneg %p111
      %p174 = scmp.lt.s32.totalorder %s15, 1
      %s175 = scalar_select %p174, %s15, 1
      %s176 = smul.addr %s175, 8
      %s177 = scalar_lea.vmem %s3, %s176
      %p178 = scmp.lt.s32.totalorder %s15, 1
      %s179 = scalar_select %p178, %s15, 1
      %s180 = smul.addr %s179, 8
      %s181 = scalar_lea.vmem %s0, %s180
      %p182 = scmp.lt.s32.totalorder %s15, 1
      %s183 = scalar_select %p182, %s15, 1
      %s184 = smul.addr %s183, 8
      %s185 = scalar_lea.vmem %s1, %s184
      %p186 = scmp.lt.s32.totalorder %s15, 1
      %s187 = scalar_select %p186, %s15, 1
      %s188 = smul.addr %s187, 8
      %s189 = scalar_lea.vmem %s2, %s188
      %p190 = scmp.lt.s32.totalorder %s15, 1
      %s191 = scalar_select %p190, %s15, 1
      %s192 = smul.addr %s191, 8
      %s193 = scalar_lea.vmem %s3, %s192
      %v194 = vld [vmem:[%s181] sm:$0xff]
      %v195 = vld [vmem:[%s185] sm:$0xff]
      %v196 = vmul.f32 %v194, %v194
      %v197 = vmul.f32 %v195, %v195
      %v198 = vadd.f32 %v196, %v197
      %v199 = vrsqrt.pop %v198
      %v200 = vmul.f32 %v198, %v199
      %vm201 = vcmp.eq.f32.partialorder %v198, inf
      %v202 = vsel %vm201, %v198, %v200
      %vm203 = vcmp.eq.f32.partialorder %v198, 0.0
      %v204 = vand.u32 %v198, 2147483648
      %v205 = vsel %vm203, %v204, %v202
      %v206 = vand.u32 2147483647, %v194
      %v207 = vand.u32 2147483647, %v195
      %v208 = vmin.f32 %v206, %v207
      %v209 = vmax.f32 %v206, %v207
      %v210 = vrcp.pop %v209
      %v211 = vmul.f32 %v208, %v210
      %v212 = vmul.f32 %v211, %v211
      %v213 = vmul.f32 0.002785687, %v212
      %v214 = vadd.f32 %v213, -0.015866
      %v215 = vmul.f32 %v214, %v212
      %v216 = vadd.f32 %v215, 0.04247222
      %v217 = vmul.f32 %v216, %v212
      %v218 = vadd.f32 %v217, -0.074975304
      %v219 = vmul.f32 %v218, %v212
      %v220 = vadd.f32 %v219, 0.1064488
      %v221 = vmul.f32 %v220, %v212
      %v222 = vadd.f32 %v221, -0.14207031
      %v223 = vmul.f32 %v222, %v212
      %v224 = vadd.f32 %v223, 0.19993454
      %v225 = vmul.f32 %v224, %v212
      %v226 = vadd.f32 %v225, -0.33333147
      %v227 = vmul.f32 %v226, %v212
      %v228 = vmul.f32 %v227, %v211
      %v229 = vadd.f32 %v228, %v211
      %vm230 = vcmp.gt.f32.partialorder %v207, %v206
      %v231 = vsub.f32 1.5707964, %v229
      %v232 = vsel %vm230, %v231, %v229
      %vm233 = vcmp.lt.f32.partialorder %v194, 0.0
      %v234 = vsub.f32 3.1415927, %v232
      %v235 = vsel %vm233, %v234, %v232
      %vm236 = vcmp.lt.s32.totalorder %v194, 0
      %v237 = vsel %vm236, 3.1415927, 0.0
      %vm238 = vcmp.eq.f32.partialorder %v195, 0.0
      %v239 = vsel %vm238, %v237, %v235
      %vm240 = vcmp.ne.f32.partialorder %v194, %v194
      %vm241 = vcmp.ne.f32.partialorder %v195, %v195
      %vm242 = vmor %vm240, %vm241
      %v243 = vsel %vm242, nan, %v239
      %vm244 = vcmp.lt.f32.partialorder %v194, 0.0
      %v245 = vsel %vm244, 2.3561945, 0.7853982
      %vm246 = vcmp.eq.s32.totalorder %v206, inf
      %vm247 = vcmp.eq.s32.totalorder %v207, inf
      %vm248 = vmand %vm246, %vm247
      %v249 = vsel %vm248, %v245, %v243
      %v250 = vand.u32 2147483647, %v249
      %v251 = vand.u32 %v195, 2147483648
      %v252 = vor.u32 %v250, %v251
      %vm253 = vcmp.lt.f32.partialorder %v252, 0.0
      %v254 = vadd.f32 %v252, 6.2831855
      %v255 = vsel %vm253, %v254, %v252
      %v256 = vmul.f32 %v255, 1.5915494
      %v257 = vround.ne.pseudo %v256
      %vm258 = vcmp.ge.f32.partialorder %v257, 10.0
      %v259 = vsub.f32 %v257, 10.0
      %v260 = vsel %vm258, %v259, %v257
      %vm261 = vcmp.eq.f32.partialorder %v260, 1.0
      %v262 = vsel %vm261, 0.809017, 1.0
      %v263 = vsel %vm261, 0.58778524, 0.0
      %vm264 = vcmp.eq.f32.partialorder %v260, 2.0
      %v265 = vsel %vm264, 0.309017, %v262
      %v266 = vsel %vm264, 0.95105654, %v263
      %vm267 = vcmp.eq.f32.partialorder %v260, 3.0
      %v268 = vsel %vm267, -0.309017, %v265
      %v269 = vsel %vm267, 0.95105654, %v266
      %vm270 = vcmp.eq.f32.partialorder %v260, 4.0
      %v271 = vsel %vm270, -0.809017, %v268
      %v272 = vsel %vm270, 0.58778524, %v269
      %vm273 = vcmp.eq.f32.partialorder %v260, 5.0
      %v274 = vsel %vm273, -1.0, %v271
      %v275 = vsel %vm273, 1.2246469e-16, %v272
      %vm276 = vcmp.eq.f32.partialorder %v260, 6.0
      %v277 = vsel %vm276, -0.809017, %v274
      %v278 = vsel %vm276, -0.58778524, %v275
      %vm279 = vcmp.eq.f32.partialorder %v260, 7.0
      %v280 = vsel %vm279, -0.309017, %v277
      %v281 = vsel %vm279, -0.95105654, %v278
      %vm282 = vcmp.eq.f32.partialorder %v260, 8.0
      %v283 = vsel %vm282, 0.309017, %v280
      %v284 = vsel %vm282, -0.95105654, %v281
      %vm285 = vcmp.eq.f32.partialorder %v260, 9.0
      %v286 = vsel %vm285, 0.809017, %v283
      %v287 = vsel %vm285, -0.58778524, %v284
      %v288 = vmul.f32 %v205, %v286
      %289 = vst [vmem:[%s189] sm:$0xff] %v288
      %v290 = vmul.f32 %v205, %v287
      %291 = vst [vmem:[%s193] sm:$0xff] %v290
      %p292 = scmp.lt.s32.totalorder %s15, 1
      %s293 = scalar_select %p292, %s15, 1
      %s294 = smul.addr %s293, 8
      %s295 = scalar_lea.vmem %s2, %s294
      %p296 = scmp.lt.s32.totalorder %s15, 1
      %s297 = scalar_select %p296, %s15, 1
      %s298 = smul.addr %s297, 8
      %s299 = scalar_lea.vmem %s3, %s298
      // Predicated region
      $region29: #{mod_mvn.1} parent=27 // pred_check
        %p300 = pneg %p85
      $region30: #{mod_mvn.1} parent=27 // pred_check_branch
        %302 = sbr.rel (%p300) target = $region32
      $region31: #{mod_mvn.1} parent=27 // pred_region
        _
      $region32: #{mod_mvn.1} parent=27 // pred_fallthru
        _
      // Predicated region
      $region33: #{mod_mvn.1} parent=27 // pred_check
        %p303 = pneg %p111
      $region34: #{mod_mvn.1} parent=27 // pred_check_branch
        %305 = sbr.rel (%p303) target = $region36
      $region35: #{mod_mvn.1} parent=27 // pred_region
        _
      $region36: #{mod_mvn.1} parent=27 // pred_fallthru
        _
    $region28: #{mod_mvn.1} parent=5 // pred_fallthru
      _
    %p306 = scmp.le.s32.totalorder 2, %s10
    // Predicated region
    $region37: #{mod_mvn.1} parent=5 // pred_check
      %p307 = pneg %p306
    $region38: #{mod_mvn.1} parent=5 // pred_check_branch
      %309 = sbr.rel (%p307) target = $region40
    $region39: #{mod_mvn.1} parent=5 // pred_region
      %s310 = ssub.s32 %s10, 2
      // Predicated region
      $region41: #{mod_mvn.1} parent=39 // pred_check
        %p311 = pneg %p91
      $region42: #{mod_mvn.1} parent=39 // pred_check_branch
        %313 = sbr.rel (%p311) target = $region44
      $region43: #{mod_mvn.1} parent=39 // pred_region
        %p314 = scmp.lt.s32.totalorder %s16, 1
        %s315 = scalar_select %p314, %s16, 1
        %s316 = smul.addr %s315, 8
        %s317 = scalar_lea.vmem %s2, %s316
      $region44: #{mod_mvn.1} parent=39 // pred_fallthru
        _
      // Predicated region
      $region45: #{mod_mvn.1} parent=39 // pred_check
        %p318 = pneg %p117
      $region46: #{mod_mvn.1} parent=39 // pred_check_branch
        %320 = sbr.rel (%p318) target = $region48
      $region47: #{mod_mvn.1} parent=39 // pred_region
        %p321 = scmp.lt.s32.totalorder %s16, 1
        %s322 = scalar_select %p321, %s16, 1
        %s323 = smul.addr %s322, 8
        %s324 = scalar_lea.vmem %s3, %s323
      $region48: #{mod_mvn.1} parent=39 // pred_fallthru
        _
    $region40: #{mod_mvn.1} parent=5 // pred_fallthru
      _
  $region6: #{mod_mvn.1} parent=0 // loop_footer
    %s14 = sadd.s32 1, %s10
  $region7: #{mod_mvn.1} parent=0 // loop_footer_branch
    %9 = sbr.rel target = $region3
  $region8: #{mod_mvn.1} parent=0 // loop_exit
    _

</llo_original>
